<compile_context>
chip_gen: v7x
topology: tpu7x:2x2x1
jax: 0.10.0
libtpu: 0.0.40
codegen_flags: <defaults>
</compile_context>

<pallas_src>
import functools

import jax
import jax.numpy as jnp
from jax.experimental import pallas as pl
from jax.experimental.pallas import tpu as pltpu

LN_EPS = 1e-5  # torch.nn.LayerNorm default


def _round_up(x, m):
    return ((x + m - 1) // m) * m


def _layernorm_onepass(x, w, b):
    # One-pass LN: sum(x) and sum(x*x) are independent reductions.
    f = x.shape[-1]
    inv_f = 1.0 / f
    s = jnp.sum(x, axis=-1, keepdims=True)
    ss = jnp.sum(x * x, axis=-1, keepdims=True)
    mean = s * inv_f
    var = ss * inv_f - mean * mean
    return (x - mean) * jax.lax.rsqrt(var + LN_EPS) * w + b


def _layernorm_ref(x, w, b):
    # Two-pass form matching PyTorch exactly (used only by the JAX reference).
    mean = jnp.mean(x, axis=-1, keepdims=True)
    var = jnp.mean(jnp.square(x - mean), axis=-1, keepdims=True)
    return (x - mean) * jax.lax.rsqrt(var + LN_EPS) * w + b


def _silu(x):
    return x * jax.nn.sigmoid(x)


def rpe_kernel(idx_ref, theta_ref, phase_ref, w_pos_ref, ln_w_ref, ln_b_ref,
               w_mid_ref, ln_wo_ref, ln_bo_ref, w_out_ref, o_ref, *,
               num_layers, mxu_dtype):
    # ---- get_feature + pos_proj, concat-free, single EUP sin ----
    # cat([cos(a), sin(a)], -1) == sin(idx * [theta, theta] + [pi/2..., 0...])
    idx = idx_ref[...]                                           # (tm, 1) f32
    feat = jnp.sin(idx * theta_ref[...] + phase_ref[...])        # (tm, in_dim)
    x = jnp.dot(feat.astype(mxu_dtype), w_pos_ref[...],
                preferred_element_type=jnp.float32)              # (tm, F)

    # ---- residual blocks: LayerNorm -> SiLU -> Linear, + residual ----
    for l in range(num_layers):
        y = _silu(_layernorm_onepass(x, ln_w_ref[l], ln_b_ref[l]))
        x = jnp.dot(y.astype(mxu_dtype), w_mid_ref[l],
                    preferred_element_type=jnp.float32) + x

    # ---- output head (W_out columns zero-padded to a multiple of 128) ----
    y = _silu(_layernorm_onepass(x, ln_wo_ref[...], ln_bo_ref[...]))
    o_ref[...] = jnp.dot(y.astype(mxu_dtype), w_out_ref[...],
                         preferred_element_type=jnp.float32).astype(o_ref.dtype)


def _num_tensorcores():
    """2 TCs per chip on v7x, 1 on v5e/v6e. Defaults to 1 if unknown."""
    try:
        kind = jax.devices()[0].device_kind.lower()
    except Exception:
        return 1
    return 2 if "v7" in kind else 1


def rpe_forward(index, params, *, max_block_rows=512, single_block_cap=4096,
                use_bf16=None):
    """index: (N,) or (N, 1) positions. Returns (N, out_dim) float32."""
    idx = jnp.asarray(index, jnp.float32).reshape(-1, 1)
    n = idx.shape[0]

    theta = params["theta"]                             # (1, in_dim//2)
    w_pos = params["w_pos"]                             # (in_dim, F)
    ln_w, ln_b = params["ln_w"], params["ln_b"]         # (L, 1, F)
    w_mid = params["w_mid"]                             # (L, F, F)
    ln_wo, ln_bo = params["ln_wo"], params["ln_bo"]     # (1, F)
    w_out = params["w_out"]                             # (F, out_dim)

    in_half = theta.shape[1]
    in_dim = 2 * in_half
    feat_dim = w_pos.shape[1]
    num_layers = w_mid.shape[0]
    out_dim = w_out.shape[1]

    # bf16 MXU operands only pay off once the MXU is the binding unit.
    if use_bf16 is None:
        use_bf16 = feat_dim >= 128
    mxu_dtype = jnp.bfloat16 if use_bf16 else jnp.float32

    # Fuse cos/sin: sin(idx*theta + pi/2) == cos(idx*theta).
    theta_full = jnp.concatenate([theta, theta], axis=-1)            # (1, in_dim)
    phase = jnp.concatenate(
        [jnp.full((1, in_half), jnp.pi / 2, jnp.float32),
         jnp.zeros((1, in_half), jnp.float32)], axis=-1)             # (1, in_dim)

    # Lane-dense output: pad out_dim up to a multiple of 128 (zero weight
    # columns) so stores are unmasked full-lane writes; slice off at the end.
    out_dim_p = _round_up(out_dim, 128)
    w_out_p = (w_out if out_dim_p == out_dim
               else jnp.pad(w_out, ((0, 0), (0, out_dim_p - out_dim))))

    w_pos_c = w_pos.astype(mxu_dtype)
    w_mid_c = w_mid.astype(mxu_dtype)
    w_out_c = w_out_p.astype(mxu_dtype)

    # ---- generation-aware row tiling ----
    # v5e/v6e (1 TC): a single big block for typical N (no per-step overhead).
    # v7x (2 TCs):    even block count so the parallel axis splits evenly.
    num_tc = _num_tensorcores()
    n8 = _round_up(max(n, 1), 8)
    if num_tc == 1 and n8 <= single_block_cap:
        num_blocks = 1
    else:
        num_blocks = -(-n8 // max_block_rows)            # ceil-div
        if num_tc > 1 and num_blocks > 1:
            num_blocks = _round_up(num_blocks, num_tc)
    block_rows = _round_up(-(-n8 // num_blocks), 8)      # multiple of 8
    n_pad = block_rows * num_blocks
    if n_pad != n:
        idx = jnp.pad(idx, ((0, n_pad - n), (0, 0)))

    cost = pl.CostEstimate(
        flops=2 * n_pad * (in_dim * feat_dim
                           + num_layers * feat_dim * feat_dim
                           + feat_dim * out_dim_p),
        # sin per feature + (sigmoid ~ exp+recip, rsqrt) per LN+SiLU stage.
        transcendentals=n_pad * (in_dim + (num_layers + 1) * (2 * feat_dim + 1)),
        bytes_accessed=4 * (n_pad * (1 + out_dim_p)
                            + 2 * in_dim
                            + in_dim * feat_dim
                            + num_layers * (feat_dim * feat_dim + 2 * feat_dim)
                            + 2 * feat_dim
                            + feat_dim * out_dim_p),
    )

    kernel = functools.partial(rpe_kernel, num_layers=num_layers,
                               mxu_dtype=mxu_dtype)

    out = pl.pallas_call(
        kernel,
        out_shape=jax.ShapeDtypeStruct((n_pad, out_dim_p), jnp.float32),
        grid_spec=pltpu.PrefetchScalarGridSpec(
            num_scalar_prefetch=0,
            grid=(num_blocks,),
            in_specs=[
                pl.BlockSpec((block_rows, 1), lambda i: (i, 0)),          # index rows
                pl.BlockSpec((1, in_dim), lambda i: (0, 0)),              # theta_full
                pl.BlockSpec((1, in_dim), lambda i: (0, 0)),              # phase
                pl.BlockSpec((in_dim, feat_dim), lambda i: (0, 0)),       # W_pos
                pl.BlockSpec((num_layers, 1, feat_dim), lambda i: (0, 0, 0)),  # LN gamma
                pl.BlockSpec((num_layers, 1, feat_dim), lambda i: (0, 0, 0)),  # LN beta
                pl.BlockSpec((num_layers, feat_dim, feat_dim), lambda i: (0, 0, 0)),  # layer W
                pl.BlockSpec((1, feat_dim), lambda i: (0, 0)),            # out LN gamma
                pl.BlockSpec((1, feat_dim), lambda i: (0, 0)),            # out LN beta
                pl.BlockSpec((feat_dim, out_dim_p), lambda i: (0, 0)),    # out W (padded)
            ],
            out_specs=pl.BlockSpec((block_rows, out_dim_p), lambda i: (i, 0)),
        ),
        compiler_params=pltpu.CompilerParams(dimension_semantics=("parallel",)),
        cost_estimate=cost,
    )(idx, theta_full, phase, w_pos_c, ln_w, ln_b, w_mid_c, ln_wo, ln_bo, w_out_c)
    return out[:n, :out_dim]


def rpe_reference(index, params):
    """Pure-JAX reference mirroring the PyTorch forward, for validation."""
    idx = jnp.asarray(index, jnp.float32).reshape(-1, 1)
    ang = idx * params["theta"]
    x = jnp.concatenate([jnp.cos(ang), jnp.sin(ang)], axis=-1)
    x = x @ params["w_pos"]
    for l in range(params["w_mid"].shape[0]):
        y = _layernorm_ref(x, params["ln_w"][l], params["ln_b"][l])
        y = _silu(y) @ params["w_mid"][l]
        x = y + x
    y = _silu(_layernorm_ref(x, params["ln_wo"], params["ln_bo"]))
    return y @ params["w_out"]


def init_params(key, in_dim, feature_dim, out_dim, rpe_layers):
    assert in_dim > 1 and in_dim % 2 == 0
    # TODO(synk): in_dim == 1 branch (feature = raw index) not implemented.
    k_pos, k_mid, k_out = jax.random.split(key, 3)
    # buffer: theta = 10000 ** (-2/in_dim * arange(in_dim//2)), shape (1, in_dim//2)
    theta = (10000.0 ** (-2.0 / in_dim * jnp.arange(in_dim // 2, dtype=jnp.float32)))
    theta = theta.reshape(1, -1)
    scale = 0.05
    params = {
        "theta": theta,
        "w_pos": scale * jax.random.normal(k_pos, (in_dim, feature_dim), jnp.float32),
        "ln_w": jnp.ones((rpe_layers, 1, feature_dim), jnp.float32),   # LayerNorm gamma
        "ln_b": jnp.zeros((rpe_layers, 1, feature_dim), jnp.float32),  # LayerNorm beta
        "w_mid": scale * jax.random.normal(
            k_mid, (rpe_layers, feature_dim, feature_dim), jnp.float32),
        "ln_wo": jnp.ones((1, feature_dim), jnp.float32),
        "ln_bo": jnp.zeros((1, feature_dim), jnp.float32),
        "w_out": scale * jax.random.normal(k_out, (feature_dim, out_dim), jnp.float32),
    }
    return params


if __name__ == "__main__":
    in_dim, feature_dim, out_dim, rpe_layers = 16, 32, 8, 3
    seq = 8  # number of relative positions

    key = jax.random.PRNGKey(0)
    params = init_params(key, in_dim, feature_dim, out_dim, rpe_layers)

    # --- small case: matches the module's typical tiny relative-index input ---
    index = jnp.arange(seq, dtype=jnp.float32).reshape(seq, 1)
    out = jax.block_until_ready(rpe_forward(index, params))
    ref = rpe_reference(index, params)
    assert out.shape == (seq, out_dim), out.shape
    assert jnp.allclose(out, ref, rtol=1e-4, atol=1e-4), (
        float(jnp.max(jnp.abs(out - ref))))

    # --- larger case: exercises row padding / generation-aware block sizing ---
    n2 = 300
    index2 = (jnp.arange(n2, dtype=jnp.float32) - n2 // 2).reshape(n2, 1)
    out2 = jax.block_until_ready(rpe_forward(index2, params))
    ref2 = rpe_reference(index2, params)
    assert out2.shape == (n2, out_dim), out2.shape
    assert jnp.allclose(out2, ref2, rtol=1e-4, atol=1e-4), (
        float(jnp.max(jnp.abs(out2 - ref2))))

    # --- multi-block case: forces >1 grid step on every generation ---
    n3 = 1200
    index3 = jnp.arange(n3, dtype=jnp.float32).reshape(n3, 1)
    out3 = jax.block_until_ready(
        rpe_forward(index3, params, single_block_cap=512))
    ref3 = rpe_reference(index3, params)
    assert out3.shape == (n3, out_dim), out3.shape
    assert jnp.allclose(out3, ref3, rtol=1e-4, atol=1e-4), (
        float(jnp.max(jnp.abs(out3 - ref3))))

    print("KERNEL_OK")
</pallas_src>

<mosaic_0001>
module attributes {stable_mosaic.version = 11 : i64} {
  func.func @rpe_kernel(%arg0: i32, %arg1: memref<8x1xf32, #tpu.memory_space<vmem>>, %arg2: memref<1x16xf32, #tpu.memory_space<vmem>>, %arg3: memref<1x16xf32, #tpu.memory_space<vmem>>, %arg4: memref<16x32xf32, #tpu.memory_space<vmem>>, %arg5: memref<3x1x32xf32, #tpu.memory_space<vmem>>, %arg6: memref<3x1x32xf32, #tpu.memory_space<vmem>>, %arg7: memref<3x32x32xf32, #tpu.memory_space<vmem>>, %arg8: memref<1x32xf32, #tpu.memory_space<vmem>>, %arg9: memref<1x32xf32, #tpu.memory_space<vmem>>, %arg10: memref<32x128xf32, #tpu.memory_space<vmem>>, %arg11: memref<8x128xf32, #tpu.memory_space<vmem>>) attributes {dimension_semantics = [#tpu.dimension_semantics<parallel>], iteration_bounds = array<i64: 1>, scalar_prefetch = 0 : i64, scratch_operands = 0 : i64, tpu.core_type = #tpu.core_type<tc>, window_params = [{transform_indices = @transform_0, window_bounds = array<i64: 8, 1>}, {pipeline_mode = #tpu.pipeline_mode<synchronous>, transform_indices = @transform_1, window_bounds = array<i64: 1, 16>}, {pipeline_mode = #tpu.pipeline_mode<synchronous>, transform_indices = @transform_2, window_bounds = array<i64: 1, 16>}, {pipeline_mode = #tpu.pipeline_mode<synchronous>, transform_indices = @transform_3, window_bounds = array<i64: 16, 32>}, {pipeline_mode = #tpu.pipeline_mode<synchronous>, transform_indices = @transform_4, window_bounds = array<i64: 3, 1, 32>}, {pipeline_mode = #tpu.pipeline_mode<synchronous>, transform_indices = @transform_5, window_bounds = array<i64: 3, 1, 32>}, {pipeline_mode = #tpu.pipeline_mode<synchronous>, transform_indices = @transform_6, window_bounds = array<i64: 3, 32, 32>}, {pipeline_mode = #tpu.pipeline_mode<synchronous>, transform_indices = @transform_7, window_bounds = array<i64: 1, 32>}, {pipeline_mode = #tpu.pipeline_mode<synchronous>, transform_indices = @transform_8, window_bounds = array<i64: 1, 32>}, {pipeline_mode = #tpu.pipeline_mode<synchronous>, transform_indices = @transform_9, window_bounds = array<i64: 32, 128>}, {transform_indices = @transform_10, window_bounds = array<i64: 8, 128>}]} {
    %c0 = arith.constant 0 : index
    %c0_0 = arith.constant 0 : index
    %0 = vector.load %arg1[%c0, %c0_0] : memref<8x1xf32, #tpu.memory_space<vmem>>, vector<8x1xf32>
    %c0_1 = arith.constant 0 : index
    %c0_2 = arith.constant 0 : index
    %1 = vector.load %arg2[%c0_1, %c0_2] : memref<1x16xf32, #tpu.memory_space<vmem>>, vector<1x16xf32>
    %2 = vector.broadcast %0 : vector<8x1xf32> to vector<8x16xf32>
    %3 = vector.broadcast %1 : vector<1x16xf32> to vector<8x16xf32>
    %4 = arith.mulf %2, %3 : vector<8x16xf32>
    %c0_3 = arith.constant 0 : index
    %c0_4 = arith.constant 0 : index
    %5 = vector.load %arg3[%c0_3, %c0_4] : memref<1x16xf32, #tpu.memory_space<vmem>>, vector<1x16xf32>
    %6 = vector.broadcast %5 : vector<1x16xf32> to vector<8x16xf32>
    %7 = arith.addf %4, %6 : vector<8x16xf32>
    %8 = math.sin %7 : vector<8x16xf32>
    %c0_5 = arith.constant 0 : index
    %c0_6 = arith.constant 0 : index
    %9 = vector.load %arg4[%c0_5, %c0_6] : memref<16x32xf32, #tpu.memory_space<vmem>>, vector<16x32xf32>
    %cst = arith.constant dense<0.000000e+00> : vector<8x32xf32>
    %10 = tpu.matmul %8, %9, %cst {dimension_numbers = #tpu.dot_dimension_numbers<[1], [0], [0], [1], [0, 0, 1, 1], [], []>} : vector<8x16xf32>, vector<16x32xf32>, vector<8x32xf32> -> vector<8x32xf32>
    %c0_7 = arith.constant 0 : index
    %c0_8 = arith.constant 0 : index
    %c0_9 = arith.constant 0 : index
    %11 = vector.load %arg5[%c0_7, %c0_8, %c0_9] : memref<3x1x32xf32, #tpu.memory_space<vmem>>, vector<1x1x32xf32>
    %12 = vector.shape_cast %11 : vector<1x1x32xf32> to vector<1x32xf32>
    %c0_10 = arith.constant 0 : index
    %c0_11 = arith.constant 0 : index
    %c0_12 = arith.constant 0 : index
    %13 = vector.load %arg6[%c0_10, %c0_11, %c0_12] : memref<3x1x32xf32, #tpu.memory_space<vmem>>, vector<1x1x32xf32>
    %14 = vector.shape_cast %13 : vector<1x1x32xf32> to vector<1x32xf32>
    %cst_13 = arith.constant dense<0.000000e+00> : vector<8xf32>
    %15 = vector.multi_reduction <add>, %10, %cst_13 [1] : vector<8x32xf32> to vector<8xf32>
    %16 = vector.shape_cast %15 : vector<8xf32> to vector<8x1xf32>
    %17 = arith.mulf %10, %10 : vector<8x32xf32>
    %cst_14 = arith.constant dense<0.000000e+00> : vector<8xf32>
    %18 = vector.multi_reduction <add>, %17, %cst_14 [1] : vector<8x32xf32> to vector<8xf32>
    %19 = vector.shape_cast %18 : vector<8xf32> to vector<8x1xf32>
    %cst_15 = arith.constant 3.125000e-02 : f32
    %20 = vector.broadcast %cst_15 : f32 to vector<8x1xf32>
    %21 = arith.mulf %16, %20 : vector<8x1xf32>
    %cst_16 = arith.constant 3.125000e-02 : f32
    %22 = vector.broadcast %cst_16 : f32 to vector<8x1xf32>
    %23 = arith.mulf %19, %22 : vector<8x1xf32>
    %24 = arith.mulf %21, %21 : vector<8x1xf32>
    %25 = arith.subf %23, %24 : vector<8x1xf32>
    %26 = vector.broadcast %21 : vector<8x1xf32> to vector<8x32xf32>
    %27 = arith.subf %10, %26 : vector<8x32xf32>
    %cst_17 = arith.constant 9.99999974E-6 : f32
    %28 = vector.broadcast %cst_17 : f32 to vector<8x1xf32>
    %29 = arith.addf %25, %28 : vector<8x1xf32>
    %30 = math.rsqrt %29 : vector<8x1xf32>
    %31 = vector.broadcast %30 : vector<8x1xf32> to vector<8x32xf32>
    %32 = arith.mulf %27, %31 : vector<8x32xf32>
    %33 = vector.broadcast %12 : vector<1x32xf32> to vector<8x32xf32>
    %34 = arith.mulf %32, %33 : vector<8x32xf32>
    %35 = vector.broadcast %14 : vector<1x32xf32> to vector<8x32xf32>
    %36 = arith.addf %34, %35 : vector<8x32xf32>
    %37 = arith.negf %36 : vector<8x32xf32>
    %38 = math.exp %37 : vector<8x32xf32>
    %cst_18 = arith.constant 1.000000e+00 : f32
    %39 = vector.broadcast %cst_18 : f32 to vector<8x32xf32>
    %40 = arith.addf %39, %38 : vector<8x32xf32>
    %41 = arith.divf %39, %40 : vector<8x32xf32>
    %42 = arith.mulf %36, %41 : vector<8x32xf32>
    %c0_19 = arith.constant 0 : index
    %c0_20 = arith.constant 0 : index
    %c0_21 = arith.constant 0 : index
    %43 = vector.load %arg7[%c0_19, %c0_20, %c0_21] : memref<3x32x32xf32, #tpu.memory_space<vmem>>, vector<1x32x32xf32>
    %44 = vector.shape_cast %43 : vector<1x32x32xf32> to vector<32x32xf32>
    %cst_22 = arith.constant dense<0.000000e+00> : vector<8x32xf32>
    %45 = tpu.matmul %42, %44, %cst_22 {dimension_numbers = #tpu.dot_dimension_numbers<[1], [0], [0], [1], [0, 0, 1, 1], [], []>} : vector<8x32xf32>, vector<32x32xf32>, vector<8x32xf32> -> vector<8x32xf32>
    %46 = arith.addf %45, %10 : vector<8x32xf32>
    %c1 = arith.constant 1 : index
    %c0_23 = arith.constant 0 : index
    %c0_24 = arith.constant 0 : index
    %47 = vector.load %arg5[%c1, %c0_23, %c0_24] : memref<3x1x32xf32, #tpu.memory_space<vmem>>, vector<1x1x32xf32>
    %48 = vector.shape_cast %47 : vector<1x1x32xf32> to vector<1x32xf32>
    %c1_25 = arith.constant 1 : index
    %c0_26 = arith.constant 0 : index
    %c0_27 = arith.constant 0 : index
    %49 = vector.load %arg6[%c1_25, %c0_26, %c0_27] : memref<3x1x32xf32, #tpu.memory_space<vmem>>, vector<1x1x32xf32>
    %50 = vector.shape_cast %49 : vector<1x1x32xf32> to vector<1x32xf32>
    %cst_28 = arith.constant dense<0.000000e+00> : vector<8xf32>
    %51 = vector.multi_reduction <add>, %46, %cst_28 [1] : vector<8x32xf32> to vector<8xf32>
    %52 = vector.shape_cast %51 : vector<8xf32> to vector<8x1xf32>
    %53 = arith.mulf %46, %46 : vector<8x32xf32>
    %cst_29 = arith.constant dense<0.000000e+00> : vector<8xf32>
    %54 = vector.multi_reduction <add>, %53, %cst_29 [1] : vector<8x32xf32> to vector<8xf32>
    %55 = vector.shape_cast %54 : vector<8xf32> to vector<8x1xf32>
    %cst_30 = arith.constant 3.125000e-02 : f32
    %56 = vector.broadcast %cst_30 : f32 to vector<8x1xf32>
    %57 = arith.mulf %52, %56 : vector<8x1xf32>
    %cst_31 = arith.constant 3.125000e-02 : f32
    %58 = vector.broadcast %cst_31 : f32 to vector<8x1xf32>
    %59 = arith.mulf %55, %58 : vector<8x1xf32>
    %60 = arith.mulf %57, %57 : vector<8x1xf32>
    %61 = arith.subf %59, %60 : vector<8x1xf32>
    %62 = vector.broadcast %57 : vector<8x1xf32> to vector<8x32xf32>
    %63 = arith.subf %46, %62 : vector<8x32xf32>
    %cst_32 = arith.constant 9.99999974E-6 : f32
    %64 = vector.broadcast %cst_32 : f32 to vector<8x1xf32>
    %65 = arith.addf %61, %64 : vector<8x1xf32>
    %66 = math.rsqrt %65 : vector<8x1xf32>
    %67 = vector.broadcast %66 : vector<8x1xf32> to vector<8x32xf32>
    %68 = arith.mulf %63, %67 : vector<8x32xf32>
    %69 = vector.broadcast %48 : vector<1x32xf32> to vector<8x32xf32>
    %70 = arith.mulf %68, %69 : vector<8x32xf32>
    %71 = vector.broadcast %50 : vector<1x32xf32> to vector<8x32xf32>
    %72 = arith.addf %70, %71 : vector<8x32xf32>
    %73 = arith.negf %72 : vector<8x32xf32>
    %74 = math.exp %73 : vector<8x32xf32>
    %cst_33 = arith.constant 1.000000e+00 : f32
    %75 = vector.broadcast %cst_33 : f32 to vector<8x32xf32>
    %76 = arith.addf %75, %74 : vector<8x32xf32>
    %77 = arith.divf %75, %76 : vector<8x32xf32>
    %78 = arith.mulf %72, %77 : vector<8x32xf32>
    %c1_34 = arith.constant 1 : index
    %c0_35 = arith.constant 0 : index
    %c0_36 = arith.constant 0 : index
    %79 = vector.load %arg7[%c1_34, %c0_35, %c0_36] : memref<3x32x32xf32, #tpu.memory_space<vmem>>, vector<1x32x32xf32>
    %80 = vector.shape_cast %79 : vector<1x32x32xf32> to vector<32x32xf32>
    %cst_37 = arith.constant dense<0.000000e+00> : vector<8x32xf32>
    %81 = tpu.matmul %78, %80, %cst_37 {dimension_numbers = #tpu.dot_dimension_numbers<[1], [0], [0], [1], [0, 0, 1, 1], [], []>} : vector<8x32xf32>, vector<32x32xf32>, vector<8x32xf32> -> vector<8x32xf32>
    %82 = arith.addf %81, %46 : vector<8x32xf32>
    %c2 = arith.constant 2 : index
    %c0_38 = arith.constant 0 : index
    %c0_39 = arith.constant 0 : index
    %83 = vector.load %arg5[%c2, %c0_38, %c0_39] : memref<3x1x32xf32, #tpu.memory_space<vmem>>, vector<1x1x32xf32>
    %84 = vector.shape_cast %83 : vector<1x1x32xf32> to vector<1x32xf32>
    %c2_40 = arith.constant 2 : index
    %c0_41 = arith.constant 0 : index
    %c0_42 = arith.constant 0 : index
    %85 = vector.load %arg6[%c2_40, %c0_41, %c0_42] : memref<3x1x32xf32, #tpu.memory_space<vmem>>, vector<1x1x32xf32>
    %86 = vector.shape_cast %85 : vector<1x1x32xf32> to vector<1x32xf32>
    %cst_43 = arith.constant dense<0.000000e+00> : vector<8xf32>
    %87 = vector.multi_reduction <add>, %82, %cst_43 [1] : vector<8x32xf32> to vector<8xf32>
    %88 = vector.shape_cast %87 : vector<8xf32> to vector<8x1xf32>
    %89 = arith.mulf %82, %82 : vector<8x32xf32>
    %cst_44 = arith.constant dense<0.000000e+00> : vector<8xf32>
    %90 = vector.multi_reduction <add>, %89, %cst_44 [1] : vector<8x32xf32> to vector<8xf32>
    %91 = vector.shape_cast %90 : vector<8xf32> to vector<8x1xf32>
    %cst_45 = arith.constant 3.125000e-02 : f32
    %92 = vector.broadcast %cst_45 : f32 to vector<8x1xf32>
    %93 = arith.mulf %88, %92 : vector<8x1xf32>
    %cst_46 = arith.constant 3.125000e-02 : f32
    %94 = vector.broadcast %cst_46 : f32 to vector<8x1xf32>
    %95 = arith.mulf %91, %94 : vector<8x1xf32>
    %96 = arith.mulf %93, %93 : vector<8x1xf32>
    %97 = arith.subf %95, %96 : vector<8x1xf32>
    %98 = vector.broadcast %93 : vector<8x1xf32> to vector<8x32xf32>
    %99 = arith.subf %82, %98 : vector<8x32xf32>
    %cst_47 = arith.constant 9.99999974E-6 : f32
    %100 = vector.broadcast %cst_47 : f32 to vector<8x1xf32>
    %101 = arith.addf %97, %100 : vector<8x1xf32>
    %102 = math.rsqrt %101 : vector<8x1xf32>
    %103 = vector.broadcast %102 : vector<8x1xf32> to vector<8x32xf32>
    %104 = arith.mulf %99, %103 : vector<8x32xf32>
    %105 = vector.broadcast %84 : vector<1x32xf32> to vector<8x32xf32>
    %106 = arith.mulf %104, %105 : vector<8x32xf32>
    %107 = vector.broadcast %86 : vector<1x32xf32> to vector<8x32xf32>
    %108 = arith.addf %106, %107 : vector<8x32xf32>
    %109 = arith.negf %108 : vector<8x32xf32>
    %110 = math.exp %109 : vector<8x32xf32>
    %cst_48 = arith.constant 1.000000e+00 : f32
    %111 = vector.broadcast %cst_48 : f32 to vector<8x32xf32>
    %112 = arith.addf %111, %110 : vector<8x32xf32>
    %113 = arith.divf %111, %112 : vector<8x32xf32>
    %114 = arith.mulf %108, %113 : vector<8x32xf32>
    %c2_49 = arith.constant 2 : index
    %c0_50 = arith.constant 0 : index
    %c0_51 = arith.constant 0 : index
    %115 = vector.load %arg7[%c2_49, %c0_50, %c0_51] : memref<3x32x32xf32, #tpu.memory_space<vmem>>, vector<1x32x32xf32>
    %116 = vector.shape_cast %115 : vector<1x32x32xf32> to vector<32x32xf32>
    %cst_52 = arith.constant dense<0.000000e+00> : vector<8x32xf32>
    %117 = tpu.matmul %114, %116, %cst_52 {dimension_numbers = #tpu.dot_dimension_numbers<[1], [0], [0], [1], [0, 0, 1, 1], [], []>} : vector<8x32xf32>, vector<32x32xf32>, vector<8x32xf32> -> vector<8x32xf32>
    %118 = arith.addf %117, %82 : vector<8x32xf32>
    %c0_53 = arith.constant 0 : index
    %c0_54 = arith.constant 0 : index
    %119 = vector.load %arg8[%c0_53, %c0_54] : memref<1x32xf32, #tpu.memory_space<vmem>>, vector<1x32xf32>
    %c0_55 = arith.constant 0 : index
    %c0_56 = arith.constant 0 : index
    %120 = vector.load %arg9[%c0_55, %c0_56] : memref<1x32xf32, #tpu.memory_space<vmem>>, vector<1x32xf32>
    %cst_57 = arith.constant dense<0.000000e+00> : vector<8xf32>
    %121 = vector.multi_reduction <add>, %118, %cst_57 [1] : vector<8x32xf32> to vector<8xf32>
    %122 = vector.shape_cast %121 : vector<8xf32> to vector<8x1xf32>
    %123 = arith.mulf %118, %118 : vector<8x32xf32>
    %cst_58 = arith.constant dense<0.000000e+00> : vector<8xf32>
    %124 = vector.multi_reduction <add>, %123, %cst_58 [1] : vector<8x32xf32> to vector<8xf32>
    %125 = vector.shape_cast %124 : vector<8xf32> to vector<8x1xf32>
    %cst_59 = arith.constant 3.125000e-02 : f32
    %126 = vector.broadcast %cst_59 : f32 to vector<8x1xf32>
    %127 = arith.mulf %122, %126 : vector<8x1xf32>
    %cst_60 = arith.constant 3.125000e-02 : f32
    %128 = vector.broadcast %cst_60 : f32 to vector<8x1xf32>
    %129 = arith.mulf %125, %128 : vector<8x1xf32>
    %130 = arith.mulf %127, %127 : vector<8x1xf32>
    %131 = arith.subf %129, %130 : vector<8x1xf32>
    %132 = vector.broadcast %127 : vector<8x1xf32> to vector<8x32xf32>
    %133 = arith.subf %118, %132 : vector<8x32xf32>
    %cst_61 = arith.constant 9.99999974E-6 : f32
    %134 = vector.broadcast %cst_61 : f32 to vector<8x1xf32>
    %135 = arith.addf %131, %134 : vector<8x1xf32>
    %136 = math.rsqrt %135 : vector<8x1xf32>
    %137 = vector.broadcast %136 : vector<8x1xf32> to vector<8x32xf32>
    %138 = arith.mulf %133, %137 : vector<8x32xf32>
    %139 = vector.broadcast %119 : vector<1x32xf32> to vector<8x32xf32>
    %140 = arith.mulf %138, %139 : vector<8x32xf32>
    %141 = vector.broadcast %120 : vector<1x32xf32> to vector<8x32xf32>
    %142 = arith.addf %140, %141 : vector<8x32xf32>
    %143 = arith.negf %142 : vector<8x32xf32>
    %144 = math.exp %143 : vector<8x32xf32>
    %cst_62 = arith.constant 1.000000e+00 : f32
    %145 = vector.broadcast %cst_62 : f32 to vector<8x32xf32>
    %146 = arith.addf %145, %144 : vector<8x32xf32>
    %147 = arith.divf %145, %146 : vector<8x32xf32>
    %148 = arith.mulf %142, %147 : vector<8x32xf32>
    %c0_63 = arith.constant 0 : index
    %c0_64 = arith.constant 0 : index
    %149 = vector.load %arg10[%c0_63, %c0_64] : memref<32x128xf32, #tpu.memory_space<vmem>>, vector<32x128xf32>
    %cst_65 = arith.constant dense<0.000000e+00> : vector<8x128xf32>
    %150 = tpu.matmul %148, %149, %cst_65 {dimension_numbers = #tpu.dot_dimension_numbers<[1], [0], [0], [1], [0, 0, 1, 1], [], []>} : vector<8x32xf32>, vector<32x128xf32>, vector<8x128xf32> -> vector<8x128xf32>
    %c0_66 = arith.constant 0 : index
    %c0_67 = arith.constant 0 : index
    %151 = vector.load %arg11[%c0_66, %c0_67] : memref<8x128xf32, #tpu.memory_space<vmem>>, vector<8x128xf32>
    tpu.vector_store %arg11[%c0_66, %c0_67], %150 {strides = array<i32>} : memref<8x128xf32, #tpu.memory_space<vmem>>, vector<8x128xf32>,
    return
  }
  func.func @transform_0(%arg0: i32) -> (i32, i32) {
    %c0_i32 = arith.constant 0 : i32
    %c0_i32_0 = arith.constant 0 : i32
    return %arg0, %c0_i32 : i32, i32
  }
  func.func @transform_1(%arg0: i32) -> (i32, i32) {
    %c0_i32 = arith.constant 0 : i32
    %c0_i32_0 = arith.constant 0 : i32
    %c0_i32_1 = arith.constant 0 : i32
    return %c0_i32, %c0_i32_0 : i32, i32
  }
  func.func @transform_2(%arg0: i32) -> (i32, i32) {
    %c0_i32 = arith.constant 0 : i32
    %c0_i32_0 = arith.constant 0 : i32
    %c0_i32_1 = arith.constant 0 : i32
    return %c0_i32, %c0_i32_0 : i32, i32
  }
  func.func @transform_3(%arg0: i32) -> (i32, i32) {
    %c0_i32 = arith.constant 0 : i32
    %c0_i32_0 = arith.constant 0 : i32
    %c0_i32_1 = arith.constant 0 : i32
    return %c0_i32, %c0_i32_0 : i32, i32
  }
  func.func @transform_4(%arg0: i32) -> (i32, i32, i32) {
    %c0_i32 = arith.constant 0 : i32
    %c0_i32_0 = arith.constant 0 : i32
    %c0_i32_1 = arith.constant 0 : i32
    %c0_i32_2 = arith.constant 0 : i32
    return %c0_i32, %c0_i32_0, %c0_i32_1 : i32, i32, i32
  }
  func.func @transform_5(%arg0: i32) -> (i32, i32, i32) {
    %c0_i32 = arith.constant 0 : i32
    %c0_i32_0 = arith.constant 0 : i32
    %c0_i32_1 = arith.constant 0 : i32
    %c0_i32_2 = arith.constant 0 : i32
    return %c0_i32, %c0_i32_0, %c0_i32_1 : i32, i32, i32
  }
  func.func @transform_6(%arg0: i32) -> (i32, i32, i32) {
    %c0_i32 = arith.constant 0 : i32
    %c0_i32_0 = arith.constant 0 : i32
    %c0_i32_1 = arith.constant 0 : i32
    %c0_i32_2 = arith.constant 0 : i32
    return %c0_i32, %c0_i32_0, %c0_i32_1 : i32, i32, i32
  }
  func.func @transform_7(%arg0: i32) -> (i32, i32) {
    %c0_i32 = arith.constant 0 : i32
    %c0_i32_0 = arith.constant 0 : i32
    %c0_i32_1 = arith.constant 0 : i32
    return %c0_i32, %c0_i32_0 : i32, i32
  }
  func.func @transform_8(%arg0: i32) -> (i32, i32) {
    %c0_i32 = arith.constant 0 : i32
    %c0_i32_0 = arith.constant 0 : i32
    %c0_i32_1 = arith.constant 0 : i32
    return %c0_i32, %c0_i32_0 : i32, i32
  }
  func.func @transform_9(%arg0: i32) -> (i32, i32) {
    %c0_i32 = arith.constant 0 : i32
    %c0_i32_0 = arith.constant 0 : i32
    %c0_i32_1 = arith.constant 0 : i32
    return %c0_i32, %c0_i32_0 : i32, i32
  }
  func.func @transform_10(%arg0: i32) -> (i32, i32) {
    %c0_i32 = arith.constant 0 : i32
    %c0_i32_0 = arith.constant 0 : i32
    return %arg0, %c0_i32 : i32, i32
  }
}

</mosaic_0001>

<llo_original>
// kernel: tpu_custom_call.1
$region0: #{tpu_custom_call.1}
  #allocation0 [shape = 'u32[]', space=smem, size = 0x4, offset = 0x4, fixed_abs, tag = 'smem constant byte address 0x4 - core index']
  #allocation1 [shape = 'u32[144,128]{1,0:T(1,128)}', space=vmem, size = 0x12000, scoped, tag = 'internal scratch']
  %s0 = inlined_call_operand.vmem [shape: f32[8,1], index: 0, kind: input, shape index: {}]
  %s1 = inlined_call_operand.vmem [shape: f32[1,16], index: 1, kind: input, shape index: {}]
  %s2 = inlined_call_operand.vmem [shape: f32[1,16], index: 2, kind: input, shape index: {}]
  %s3 = inlined_call_operand.hbm [shape: f32[16,32], index: 3, kind: input, shape index: {}]
  %s4 = inlined_call_operand.vmem [shape: f32[3,1,32], index: 4, kind: input, shape index: {}]
  %s5 = inlined_call_operand.vmem [shape: f32[3,1,32], index: 5, kind: input, shape index: {}]
  %s6 = inlined_call_operand.hbm [shape: f32[3,32,32], index: 6, kind: input, shape index: {}]
  %s7 = inlined_call_operand.vmem [shape: f32[1,32], index: 7, kind: input, shape index: {}]
  %s8 = inlined_call_operand.vmem [shape: f32[1,32], index: 8, kind: input, shape index: {}]
  %s9 = inlined_call_operand.vmem [shape: f32[32,128], index: 9, kind: input, shape index: {}]
  %s10 = inlined_call_operand.hbm [shape: f32[8,128], index: 10, kind: output, shape index: {}]
  %s11 = sld [smem:[#allocation0]]
  $region58: #{tpu_custom_call.1} parent=0
    _
  %s13 = ssub.s32 1, %s11
  %s14 = scalar_select 0, %s13, %s11
  $region1: #{tpu_custom_call.1} parent=0
    #allocation2 [shape = 'u8[8192]{0}', space=vmem, size = 0x2000, scoped, tag = 'input window, operand 3, single buffered']
    #allocation3 [shape = 's32[1]{0}', space=sflag, size = 0x4, scoped, tag = 'scoped memory for tpu_custom_call.1']
    #allocation4 [shape = 's32[1]{0}', space=sflag, size = 0x4, scoped, tag = 'scoped memory for tpu_custom_call.1']
    #allocation5 [shape = 'u8[49152]{0}', space=vmem, size = 0xc000, scoped, tag = 'input window, operand 6, single buffered']
    #allocation6 [shape = 's32[1]{0}', space=sflag, size = 0x4, scoped, tag = 'scoped memory for tpu_custom_call.1']
    #allocation7 [shape = 'u8[4096]{0}', space=vmem, size = 0x1000, scoped, tag = 'output window, operand 0, single buffered']
    %15 = vsyncpa [#allocation3], 0
    %16 = vsyncpa [#allocation6], 0
    %17 = vsyncpa [#allocation4], 0
    // Predicated region
    $region2: #{tpu_custom_call.1} parent=1 // pred_check
      _
    $region3: #{tpu_custom_call.1} parent=1 // pred_check_branch
      %19 = sbr.rel (0) target = $region5
    $region4: #{tpu_custom_call.1} parent=1 // pred_region
      _
    $region5: #{tpu_custom_call.1} parent=1 // pred_fallthru
      _
    // Predicated region
    $region6: #{tpu_custom_call.1} parent=1 // pred_check
      _
    $region7: #{tpu_custom_call.1} parent=1 // pred_check_branch
      %21 = sbr.rel (0) target = $region9
    $region8: #{tpu_custom_call.1} parent=1 // pred_region
      _
    $region9: #{tpu_custom_call.1} parent=1 // pred_fallthru
      _
    // Predicated region
    $region10: #{tpu_custom_call.1} parent=1 // pred_check
      _
    $region11: #{tpu_custom_call.1} parent=1 // pred_check_branch
      %23 = sbr.rel (0) target = $region13
    $region12: #{tpu_custom_call.1} parent=1 // pred_region
      _
    $region13: #{tpu_custom_call.1} parent=1 // pred_fallthru
      _
    // Predicated region
    $region14: #{tpu_custom_call.1} parent=1 // pred_check
      _
    $region15: #{tpu_custom_call.1} parent=1 // pred_check_branch
      %25 = sbr.rel (0) target = $region17
    $region16: #{tpu_custom_call.1} parent=1 // pred_region
      %s27 = ssub.s32 256, 256
      %28 = vsyncadd [#allocation3], %s27
      %s29 = sshll.u32 [#allocation2], 4
      %s30 = int_to_ptr.vmem [resolvable:$true] %s29
      %35 = dma.hbm_to_vmem [thread:$0]  %s3, 256, %s30, [#allocation3], 128, 128, 8
    $region17: #{tpu_custom_call.1} parent=1 // pred_fallthru
      _
    // Predicated region
    $region18: #{tpu_custom_call.1} parent=1 // pred_check
      _
    $region19: #{tpu_custom_call.1} parent=1 // pred_check_branch
      %37 = sbr.rel (0) target = $region21
    $region20: #{tpu_custom_call.1} parent=1 // pred_region
      _
    $region21: #{tpu_custom_call.1} parent=1 // pred_fallthru
      _
    // Predicated region
    $region22: #{tpu_custom_call.1} parent=1 // pred_check
      _
    $region23: #{tpu_custom_call.1} parent=1 // pred_check_branch
      %39 = sbr.rel (0) target = $region25
    $region24: #{tpu_custom_call.1} parent=1 // pred_region
      _
    $region25: #{tpu_custom_call.1} parent=1 // pred_fallthru
      _
    // Predicated region
    $region26: #{tpu_custom_call.1} parent=1 // pred_check
      _
    $region27: #{tpu_custom_call.1} parent=1 // pred_check_branch
      %41 = sbr.rel (0) target = $region29
    $region28: #{tpu_custom_call.1} parent=1 // pred_region
      %s43 = ssub.s32 1536, 1536
      %44 = vsyncadd [#allocation6], %s43
      %s45 = sshll.u32 [#allocation5], 4
      %s46 = int_to_ptr.vmem [resolvable:$true] %s45
      %51 = dma.hbm_to_vmem [thread:$0]  %s6, 1536, %s46, [#allocation6], 128, 128, 8
    $region29: #{tpu_custom_call.1} parent=1 // pred_fallthru
      _
    // Predicated region
    $region30: #{tpu_custom_call.1} parent=1 // pred_check
      _
    $region31: #{tpu_custom_call.1} parent=1 // pred_check_branch
      %53 = sbr.rel (0) target = $region33
    $region32: #{tpu_custom_call.1} parent=1 // pred_region
      _
    $region33: #{tpu_custom_call.1} parent=1 // pred_fallthru
      _
    // Predicated region
    $region34: #{tpu_custom_call.1} parent=1 // pred_check
      _
    $region35: #{tpu_custom_call.1} parent=1 // pred_check_branch
      %55 = sbr.rel (0) target = $region37
    $region36: #{tpu_custom_call.1} parent=1 // pred_region
      _
    $region37: #{tpu_custom_call.1} parent=1 // pred_fallthru
      _
    // Predicated region
    $region38: #{tpu_custom_call.1} parent=1 // pred_check
      _
    $region39: #{tpu_custom_call.1} parent=1 // pred_check_branch
      %57 = sbr.rel (0) target = $region41
    $region40: #{tpu_custom_call.1} parent=1 // pred_region
      _
    $region41: #{tpu_custom_call.1} parent=1 // pred_fallthru
      _
    // Predicated region
    $region42: #{tpu_custom_call.1} parent=1 // pred_check
      _
    $region43: #{tpu_custom_call.1} parent=1 // pred_check_branch
      %59 = sbr.rel (0) target = $region45
    $region44: #{tpu_custom_call.1} parent=1 // pred_region
      %60 = dma.done [#allocation3], 256
    $region45: #{tpu_custom_call.1} parent=1 // pred_fallthru
      _
    // Predicated region
    $region46: #{tpu_custom_call.1} parent=1 // pred_check
      _
    $region47: #{tpu_custom_call.1} parent=1 // pred_check_branch
      %62 = sbr.rel (0) target = $region49
    $region48: #{tpu_custom_call.1} parent=1 // pred_region
      %63 = dma.done [#allocation6], 1536
    $region49: #{tpu_custom_call.1} parent=1 // pred_fallthru
      _
    %v64 = vld [vmem:[%s0] sm:$0xff]
    %v65 = vld [vmem:[%s1] sm:$0x1]
    %67 = vset.pattern.permute.xlu0 0
    %68 = vperm.xlu0 %67, %v64
    %v69 = vpop.permute.xlu0 %68
    %v72 = vlaneseq
    %v73 = vshrl.u32 %v72, 7
    %v74 = vsub.s32 0, %v73
    %v75 = vrot.slane %v65, %v74
    %v77 = vmul.f32 %v69, %v75
    %v78 = vld [vmem:[%s2] sm:$0x1]
    %v80 = vlaneseq
    %v81 = vshrl.u32 %v80, 7
    %v82 = vsub.s32 0, %v81
    %v83 = vrot.slane %v78, %v82
    %v85 = vadd.f32 %v77, %v83
    %v86 = vand.u32 2147483647, %v85
    %vm87 = vcmp.le.f32.partialorder %v86, 0.7853982
    %vm88 = vcmp.lt.s32.totalorder %v85, 0
    %v89 = vand.u32 %v85, 2139095040
    %v90 = vshrl.u32 %v89, 23
    %v91 = vsub.s32 %v90, 127
    %v92 = vand.u32 2147483647, %v85
    %v93 = vand.u32 %v92, 8388607
    %v94 = vor.u32 %v93, 8388608
    %v95 = vsub.s32 0, %v94
    %v96 = vadd.s32 %v91, 1
    %vm97 = vcmp.gt.s32.totalorder %v96, 0
    %v98 = vsel %vm97, %v96, 0
    %v99 = vshrl.u32 %v98, 5
    %v100 = vand.u32 %v98, 31
    %v101 = vsub.s32 32, %v100
    %v102 = vshrl.u32 683565275, %v101
    %v103 = vshll.u32 683565275, %v100
    %v104 = vshrl.u32 2475754826, %v101
    %v105 = vor.u32 %v103, %v104
    %v106 = vshll.u32 2475754826, %v100
    %v107 = vshrl.u32 2131351028, %v101
    %v108 = vor.u32 %v106, %v107
    %v109 = vshll.u32 2131351028, %v100
    %v110 = vshrl.u32 2102212464, %v101
    %v111 = vor.u32 %v109, %v110
    %v112 = vshll.u32 2102212464, %v100
    %v113 = vshrl.u32 920167782, %v101
    %v114 = vor.u32 %v112, %v113
    %v115 = vshll.u32 920167782, %v100
    %v116 = vshrl.u32 1326507024, %v101
    %v117 = vor.u32 %v115, %v116
    %vm118 = vcmp.lt.s32.totalorder %v99, 1
    %vm119 = vcmp.lt.s32.totalorder %v99, 2
    %vm120 = vcmp.lt.s32.totalorder %v99, 3
    %vm121 = vcmp.lt.s32.totalorder %v99, 4
    %v122 = vsel %vm118, %v102, %v105
    %v123 = vsel %vm121, %v111, 2102212464
    %v124 = vsel %vm120, %v108, %v123
    %v125 = vsel %vm119, %v122, %v124
    %v126 = vsel %vm118, %v105, %v108
    %v127 = vsel %vm121, %v114, 920167782
    %v128 = vsel %vm120, %v111, %v127
    %v129 = vsel %vm119, %v126, %v128
    %v130 = vsel %vm118, %v108, %v111
    %v131 = vsel %vm121, %v117, 1326507024
    %v132 = vsel %vm120, %v114, %v131
    %v133 = vsel %vm119, %v130, %v132
    %v134 = vshll.u32 %v94, 8
    %v135 = vmul.u32.u64.compose %v134, %v133
    %v136 = vextract.low.u32 %v135
    %v137 = vextract.high.u32 %v135
    %v138 = vmul.u32.u64.compose %v134, %v129
    %v139 = vextract.low.u32 %v138
    %v140 = vextract.high.u32 %v138
    %v141 = vmul.u32 %v134, %v125
    %v142 = vadd.s32 %v137, %v139
    %vm143 = vc.u32 %v137, %v139
    %v144 = vadd.s32 %v140, 1
    %v145 = vsel %vm143, %v144, %v140
    %v146 = vadd.s32 %v141, %v145
    %v147 = vadd.s32 %v146, 536870912
    %v148 = vshrl.u32 %v147, 30
    %v149 = vshll.u32 %v148, 30
    %v150 = vsub.s32 %v146, %v149
    %vm151 = vcmp.lt.s32.totalorder %v150, 0
    %v152 = vsub.s32 0, %v150
    %v153 = vsel %vm151, %v152, %v150
    %v154 = vclz %v153
    %v155 = vsub.s32 %v154, 2
    %vm156 = vcmp.gt.s32.totalorder 0, %v155
    %v157 = vsel %vm156, 0, %v155
    %v158 = vsub.s32 32, %v157
    %v159 = vshll.u32 %v150, %v157
    %v160 = vshrl.u32 %v142, %v158
    %v161 = vor.u32 %v159, %v160
    %v162 = vsub.s32 4294967266, %v157
    %v163 = vadd.s32 %v162, 127
    %v164 = vshll.u32 %v163, 23
    %v165 = vor.u32 4788187, %v164
    %v166 = vand.u32 2147483647, %v165
    %v168 = vcvt.s32.f32 %v161
    %v169 = vmul.f32 %v168, %v166
    %v170 = vxor.u32 %v169, 2147483648
    %v171 = vsel %vm88, %v170, %v169
    %v172 = vsub.s32 4, %v148
    %v173 = vsel %vm88, %v172, %v148
    %v174 = vsel %vm87, %v85, %v171
    %v175 = vsel %vm87, 0, %v173
    %v176 = vcosq.f32.pop %v174
    %v177 = vsinq.f32.pop %v174
    %vm178 = vweird.f32 %v85
    %v179 = vadd.s32 %v175, 3
    %v180 = vand.u32 %v179, 3
    %vm181 = vcmp.lt.s32.totalorder %v180, 2
    %vm182 = vcmp.eq.s32.totalorder %v180, 0
    %v183 = vxor.u32 %v177, 2147483648
    %v184 = vsel %vm182, %v176, %v183
    %vm185 = vcmp.eq.s32.totalorder %v180, 2
    %v186 = vxor.u32 %v176, 2147483648
    %v187 = vsel %vm185, %v186, %v177
    %v188 = vsel %vm181, %v184, %v187
    %v189 = vsel %vm178, nan, %v188
    %v190 = vld [vmem:[#allocation2] sm:$0xff]
    %v191 = vld [vmem:[#allocation2 + $0x8] sm:$0xff]
    %vm192 = vcmask 130048
    %v194 = vsel %vm192, %v189, 0
    %196 = vmatprep.subr.mxu0 0.0
    %197 = vmatpush1.msra.mxu0 %v190
    %198 = vmatprep.subr.mxu0 0.0
    %199 = vmatpush1.msra.mxu0 %v191
    %200 = vmatprep.subr.mxu0 0.0
    %201 = vmatpush1.msra.mxu0 0.0
    %202 = vmatprep.subr.mxu0 0.0
    %203 = vmatpush1.msra.mxu0 0.0
    %204 = vmatprep.subr.mxu0 0.0
    %205 = vmatpush1.msra.mxu0 0.0
    %206 = vmatprep.subr.mxu0 0.0
    %207 = vmatpush1.msra.mxu0 0.0
    %208 = vmatprep.subr.mxu0 0.0
    %209 = vmatpush1.msra.mxu0 0.0
    %210 = vmatprep.subr.mxu0 0.0
    %211 = vmatpush1.msra.mxu0 0.0
    %212 = vmatprep.subr.mxu0 0.0
    %213 = vmatpush1.msra.mxu0 0.0
    %214 = vmatprep.subr.mxu0 0.0
    %215 = vmatpush1.msra.mxu0 0.0
    %216 = vmatprep.subr.mxu0 0.0
    %217 = vmatpush1.msra.mxu0 0.0
    %218 = vmatprep.subr.mxu0 0.0
    %219 = vmatpush1.msra.mxu0 0.0
    %220 = vmatprep.subr.mxu0 0.0
    %221 = vmatpush1.msra.mxu0 0.0
    %222 = vmatprep.subr.mxu0 0.0
    %223 = vmatpush1.msra.mxu0 0.0
    %224 = vmatprep.subr.mxu0 0.0
    %225 = vmatpush1.msra.mxu0 0.0
    %226 = vmatprep.subr.mxu0 0.0
    %227 = vmatpush1.msra.mxu0 0.0
    %228 = vmatprep.subr.mxu0 0.0
    %229 = vmatpush1.msra.mxu0 0.0
    %230 = vmatprep.subr.mxu0 0.0
    %231 = vmatpush1.msra.mxu0 0.0
    %232 = vmatprep.subr.mxu0 0.0
    %233 = vmatpush1.msra.mxu0 0.0
    %234 = vmatprep.subr.mxu0 0.0
    %235 = vmatpush1.msra.mxu0 0.0
    %236 = vmatprep.subr.mxu0 0.0
    %237 = vmatpush1.msra.mxu0 0.0
    %238 = vmatprep.subr.mxu0 0.0
    %239 = vmatpush1.msra.mxu0 0.0
    %240 = vmatprep.subr.mxu0 0.0
    %241 = vmatpush1.msra.mxu0 0.0
    %242 = vmatprep.subr.mxu0 0.0
    %243 = vmatpush1.msra.mxu0 0.0
    %244 = vmatprep.subr.mxu0 0.0
    %245 = vmatpush1.msra.mxu0 0.0
    %246 = vmatprep.subr.mxu0 0.0
    %247 = vmatpush1.msra.mxu0 0.0
    %248 = vmatprep.subr.mxu0 0.0
    %249 = vmatpush1.msra.mxu0 0.0
    %250 = vmatprep.subr.mxu0 0.0
    %251 = vmatpush1.msra.mxu0 0.0
    %252 = vmatprep.subr.mxu0 0.0
    %253 = vmatpush1.msra.mxu0 0.0
    %254 = vmatprep.subr.mxu0 0.0
    %255 = vmatpush1.msra.mxu0 0.0
    %256 = vmatprep.subr.mxu0 0.0
    %257 = vmatpush1.msra.mxu0 0.0
    %258 = vmatprep.subr.mxu0 0.0
    %259 = vmatpush1.msra.mxu0 0.0
    %260 = vmatprep.mubr.f32.mxu0 0.0
    %261 = vmatmul.mubr.f32.gmra.mrb[0].mxu0 %v194
    %v262 = vpop.f32.mrb[0].mxu0
    %v263 = vadd.f32 0.0, %v262
    %v264 = vpop.f32.mrb[0].mxu0
    %265 = vdwg.mxu0
    %v266 = vld [vmem:[%s4] sm:$0x1]
    %v267 = vld [vmem:[%s5] sm:$0x1]
    %vm268 = vcmask 261120
    %v269 = vsel %vm268, %v263, 0.0
    %270 = vadd.xlane.f32.xlu0 %v269
    %v271 = vpop.xlane.xlu0 %270
    %v272 = vmul.f32 %v263, %v263
    %v273 = vsel %vm268, %v272, 0.0
    %274 = vadd.xlane.f32.xlu0 %v273
    %v275 = vpop.xlane.xlu0 %274
    %v276 = vmul.f32 %v271, 0.03125
    %v277 = vmul.f32 %v275, 0.03125
    %v278 = vmul.f32 %v276, %v276
    %v279 = vsub.f32 %v277, %v278
    %v280 = vsub.f32 %v263, %v276
    %v281 = vadd.f32 %v279, 1e-05
    %v282 = vrsqrt.pop %v281
    %v283 = vmul.f32 %v280, %v282
    %v285 = vlaneseq
    %v286 = vshrl.u32 %v285, 7
    %v287 = vsub.s32 0, %v286
    %v288 = vrot.slane %v266, %v287
    %v290 = vmul.f32 %v283, %v288
    %v292 = vlaneseq
    %v293 = vshrl.u32 %v292, 7
    %v294 = vsub.s32 0, %v293
    %v295 = vrot.slane %v267, %v294
    %v297 = vadd.f32 %v290, %v295
    %v298 = vxor.u32 %v297, 2147483648
    %v299 = vmul.f32 %v298, 1.442695
    %v300 = vpow.pop %v299
    %v301 = vadd.f32 %v300, 1.0
    %v302 = vrcp.pop %v301
    %v303 = vmul.f32 1.0, %v302
    %v304 = vmul.f32 %v297, %v303
    %v305 = vld [vmem:[#allocation5] sm:$0xff]
    %v306 = vld [vmem:[#allocation5 + $0x8] sm:$0xff]
    %v307 = vld [vmem:[#allocation5 + $0x10] sm:$0xff]
    %v308 = vld [vmem:[#allocation5 + $0x18] sm:$0xff]
    %v310 = vsel %vm268, %v304, 0
    %312 = vmatprep.subr.mxu0 0.0
    %313 = vmatpush1.msra.mxu0 %v305
    %314 = vmatprep.subr.mxu0 0.0
    %315 = vmatpush1.msra.mxu0 %v306
    %316 = vmatprep.subr.mxu0 0.0
    %317 = vmatpush1.msra.mxu0 %v307
    %318 = vmatprep.subr.mxu0 0.0
    %319 = vmatpush1.msra.mxu0 %v308
    %320 = vmatprep.subr.mxu0 0.0
    %321 = vmatpush1.msra.mxu0 0.0
    %322 = vmatprep.subr.mxu0 0.0
    %323 = vmatpush1.msra.mxu0 0.0
    %324 = vmatprep.subr.mxu0 0.0
    %325 = vmatpush1.msra.mxu0 0.0
    %326 = vmatprep.subr.mxu0 0.0
    %327 = vmatpush1.msra.mxu0 0.0
    %328 = vmatprep.subr.mxu0 0.0
    %329 = vmatpush1.msra.mxu0 0.0
    %330 = vmatprep.subr.mxu0 0.0
    %331 = vmatpush1.msra.mxu0 0.0
    %332 = vmatprep.subr.mxu0 0.0
    %333 = vmatpush1.msra.mxu0 0.0
    %334 = vmatprep.subr.mxu0 0.0
    %335 = vmatpush1.msra.mxu0 0.0
    %336 = vmatprep.subr.mxu0 0.0
    %337 = vmatpush1.msra.mxu0 0.0
    %338 = vmatprep.subr.mxu0 0.0
    %339 = vmatpush1.msra.mxu0 0.0
    %340 = vmatprep.subr.mxu0 0.0
    %341 = vmatpush1.msra.mxu0 0.0
    %342 = vmatprep.subr.mxu0 0.0
    %343 = vmatpush1.msra.mxu0 0.0
    %344 = vmatprep.subr.mxu0 0.0
    %345 = vmatpush1.msra.mxu0 0.0
    %346 = vmatprep.subr.mxu0 0.0
    %347 = vmatpush1.msra.mxu0 0.0
    %348 = vmatprep.subr.mxu0 0.0
    %349 = vmatpush1.msra.mxu0 0.0
    %350 = vmatprep.subr.mxu0 0.0
    %351 = vmatpush1.msra.mxu0 0.0
    %352 = vmatprep.subr.mxu0 0.0
    %353 = vmatpush1.msra.mxu0 0.0
    %354 = vmatprep.subr.mxu0 0.0
    %355 = vmatpush1.msra.mxu0 0.0
    %356 = vmatprep.subr.mxu0 0.0
    %357 = vmatpush1.msra.mxu0 0.0
    %358 = vmatprep.subr.mxu0 0.0
    %359 = vmatpush1.msra.mxu0 0.0
    %360 = vmatprep.subr.mxu0 0.0
    %361 = vmatpush1.msra.mxu0 0.0
    %362 = vmatprep.subr.mxu0 0.0
    %363 = vmatpush1.msra.mxu0 0.0
    %364 = vmatprep.subr.mxu0 0.0
    %365 = vmatpush1.msra.mxu0 0.0
    %366 = vmatprep.subr.mxu0 0.0
    %367 = vmatpush1.msra.mxu0 0.0
    %368 = vmatprep.subr.mxu0 0.0
    %369 = vmatpush1.msra.mxu0 0.0
    %370 = vmatprep.subr.mxu0 0.0
    %371 = vmatpush1.msra.mxu0 0.0
    %372 = vmatprep.subr.mxu0 0.0
    %373 = vmatpush1.msra.mxu0 0.0
    %374 = vmatprep.subr.mxu0 0.0
    %375 = vmatpush1.msra.mxu0 0.0
    %376 = vmatprep.mubr.f32.mxu0 0.0
    %377 = vmatmul.mubr.f32.gmra.mrb[0].mxu0 %v310
    %v378 = vpop.f32.mrb[0].mxu0
    %v379 = vadd.f32 %v263, %v378
    %v380 = vpop.f32.mrb[0].mxu0
    %381 = vdwg.mxu0
    %s382 = scalar_lea.vmem %s4, 1
    %v383 = vld [vmem:[%s382] sm:$0x1]
    %s384 = scalar_lea.vmem %s5, 1
    %v385 = vld [vmem:[%s384] sm:$0x1]
    %v386 = vsel %vm268, %v379, 0.0
    %387 = vadd.xlane.f32.xlu0 %v386
    %v388 = vpop.xlane.xlu0 %387
    %v389 = vmul.f32 %v379, %v379
    %v390 = vsel %vm268, %v389, 0.0
    %391 = vadd.xlane.f32.xlu0 %v390
    %v392 = vpop.xlane.xlu0 %391
    %v393 = vmul.f32 %v388, 0.03125
    %v394 = vmul.f32 %v392, 0.03125
    %v395 = vmul.f32 %v393, %v393
    %v396 = vsub.f32 %v394, %v395
    %v397 = vsub.f32 %v379, %v393
    %v398 = vadd.f32 %v396, 1e-05
    %v399 = vrsqrt.pop %v398
    %v400 = vmul.f32 %v397, %v399
    %v402 = vlaneseq
    %v403 = vshrl.u32 %v402, 7
    %v404 = vsub.s32 0, %v403
    %v405 = vrot.slane %v383, %v404
    %v407 = vmul.f32 %v400, %v405
    %v409 = vlaneseq
    %v410 = vshrl.u32 %v409, 7
    %v411 = vsub.s32 0, %v410
    %v412 = vrot.slane %v385, %v411
    %v414 = vadd.f32 %v407, %v412
    %v415 = vxor.u32 %v414, 2147483648
    %v416 = vmul.f32 %v415, 1.442695
    %v417 = vpow.pop %v416
    %v418 = vadd.f32 %v417, 1.0
    %v419 = vrcp.pop %v418
    %v420 = vmul.f32 1.0, %v419
    %v421 = vmul.f32 %v414, %v420
    %s422 = scalar_lea.vmem [#allocation5], 32
    %v423 = vld [vmem:[%s422] sm:$0xff]
    %v424 = vld [vmem:[%s422 + $0x8] sm:$0xff]
    %v425 = vld [vmem:[%s422 + $0x10] sm:$0xff]
    %v426 = vld [vmem:[%s422 + $0x18] sm:$0xff]
    %v428 = vsel %vm268, %v421, 0
    %430 = vmatprep.subr.mxu0 0.0
    %431 = vmatpush1.msra.mxu0 %v423
    %432 = vmatprep.subr.mxu0 0.0
    %433 = vmatpush1.msra.mxu0 %v424
    %434 = vmatprep.subr.mxu0 0.0
    %435 = vmatpush1.msra.mxu0 %v425
    %436 = vmatprep.subr.mxu0 0.0
    %437 = vmatpush1.msra.mxu0 %v426
    %438 = vmatprep.subr.mxu0 0.0
    %439 = vmatpush1.msra.mxu0 0.0
    %440 = vmatprep.subr.mxu0 0.0
    %441 = vmatpush1.msra.mxu0 0.0
    %442 = vmatprep.subr.mxu0 0.0
    %443 = vmatpush1.msra.mxu0 0.0
    %444 = vmatprep.subr.mxu0 0.0
    %445 = vmatpush1.msra.mxu0 0.0
    %446 = vmatprep.subr.mxu0 0.0
    %447 = vmatpush1.msra.mxu0 0.0
    %448 = vmatprep.subr.mxu0 0.0
    %449 = vmatpush1.msra.mxu0 0.0
    %450 = vmatprep.subr.mxu0 0.0
    %451 = vmatpush1.msra.mxu0 0.0
    %452 = vmatprep.subr.mxu0 0.0
    %453 = vmatpush1.msra.mxu0 0.0
    %454 = vmatprep.subr.mxu0 0.0
    %455 = vmatpush1.msra.mxu0 0.0
    %456 = vmatprep.subr.mxu0 0.0
    %457 = vmatpush1.msra.mxu0 0.0
    %458 = vmatprep.subr.mxu0 0.0
    %459 = vmatpush1.msra.mxu0 0.0
    %460 = vmatprep.subr.mxu0 0.0
    %461 = vmatpush1.msra.mxu0 0.0
    %462 = vmatprep.subr.mxu0 0.0
    %463 = vmatpush1.msra.mxu0 0.0
    %464 = vmatprep.subr.mxu0 0.0
    %465 = vmatpush1.msra.mxu0 0.0
    %466 = vmatprep.subr.mxu0 0.0
    %467 = vmatpush1.msra.mxu0 0.0
    %468 = vmatprep.subr.mxu0 0.0
    %469 = vmatpush1.msra.mxu0 0.0
    %470 = vmatprep.subr.mxu0 0.0
    %471 = vmatpush1.msra.mxu0 0.0
    %472 = vmatprep.subr.mxu0 0.0
    %473 = vmatpush1.msra.mxu0 0.0
    %474 = vmatprep.subr.mxu0 0.0
    %475 = vmatpush1.msra.mxu0 0.0
    %476 = vmatprep.subr.mxu0 0.0
    %477 = vmatpush1.msra.mxu0 0.0
    %478 = vmatprep.subr.mxu0 0.0
    %479 = vmatpush1.msra.mxu0 0.0
    %480 = vmatprep.subr.mxu0 0.0
    %481 = vmatpush1.msra.mxu0 0.0
    %482 = vmatprep.subr.mxu0 0.0
    %483 = vmatpush1.msra.mxu0 0.0
    %484 = vmatprep.subr.mxu0 0.0
    %485 = vmatpush1.msra.mxu0 0.0
    %486 = vmatprep.subr.mxu0 0.0
    %487 = vmatpush1.msra.mxu0 0.0
    %488 = vmatprep.subr.mxu0 0.0
    %489 = vmatpush1.msra.mxu0 0.0
    %490 = vmatprep.subr.mxu0 0.0
    %491 = vmatpush1.msra.mxu0 0.0
    %492 = vmatprep.subr.mxu0 0.0
    %493 = vmatpush1.msra.mxu0 0.0
    %494 = vmatprep.mubr.f32.mxu0 0.0
    %495 = vmatmul.mubr.f32.gmra.mrb[0].mxu0 %v428
    %v496 = vpop.f32.mrb[0].mxu0
    %v497 = vadd.f32 %v379, %v496
    %v498 = vpop.f32.mrb[0].mxu0
    %499 = vdwg.mxu0
    %s500 = scalar_lea.vmem %s4, 2
    %v501 = vld [vmem:[%s500] sm:$0x1]
    %s502 = scalar_lea.vmem %s5, 2
    %v503 = vld [vmem:[%s502] sm:$0x1]
    %v504 = vsel %vm268, %v497, 0.0
    %505 = vadd.xlane.f32.xlu0 %v504
    %v506 = vpop.xlane.xlu0 %505
    %v507 = vmul.f32 %v497, %v497
    %v508 = vsel %vm268, %v507, 0.0
    %509 = vadd.xlane.f32.xlu0 %v508
    %v510 = vpop.xlane.xlu0 %509
    %v511 = vmul.f32 %v506, 0.03125
    %v512 = vmul.f32 %v510, 0.03125
    %v513 = vmul.f32 %v511, %v511
    %v514 = vsub.f32 %v512, %v513
    %v515 = vsub.f32 %v497, %v511
    %v516 = vadd.f32 %v514, 1e-05
    %v517 = vrsqrt.pop %v516
    %v518 = vmul.f32 %v515, %v517
    %v520 = vlaneseq
    %v521 = vshrl.u32 %v520, 7
    %v522 = vsub.s32 0, %v521
    %v523 = vrot.slane %v501, %v522
    %v525 = vmul.f32 %v518, %v523
    %v527 = vlaneseq
    %v528 = vshrl.u32 %v527, 7
    %v529 = vsub.s32 0, %v528
    %v530 = vrot.slane %v503, %v529
    %v532 = vadd.f32 %v525, %v530
    %v533 = vxor.u32 %v532, 2147483648
    %v534 = vmul.f32 %v533, 1.442695
    %v535 = vpow.pop %v534
    %v536 = vadd.f32 %v535, 1.0
    %v537 = vrcp.pop %v536
    %v538 = vmul.f32 1.0, %v537
    %v539 = vmul.f32 %v532, %v538
    %s540 = scalar_lea.vmem [#allocation5], 64
    %v541 = vld [vmem:[%s540] sm:$0xff]
    %v542 = vld [vmem:[%s540 + $0x8] sm:$0xff]
    %v543 = vld [vmem:[%s540 + $0x10] sm:$0xff]
    %v544 = vld [vmem:[%s540 + $0x18] sm:$0xff]
    %v546 = vsel %vm268, %v539, 0
    %548 = vmatprep.subr.mxu0 0.0
    %549 = vmatpush1.msra.mxu0 %v541
    %550 = vmatprep.subr.mxu0 0.0
    %551 = vmatpush1.msra.mxu0 %v542
    %552 = vmatprep.subr.mxu0 0.0
    %553 = vmatpush1.msra.mxu0 %v543
    %554 = vmatprep.subr.mxu0 0.0
    %555 = vmatpush1.msra.mxu0 %v544
    %556 = vmatprep.subr.mxu0 0.0
    %557 = vmatpush1.msra.mxu0 0.0
    %558 = vmatprep.subr.mxu0 0.0
    %559 = vmatpush1.msra.mxu0 0.0
    %560 = vmatprep.subr.mxu0 0.0
    %561 = vmatpush1.msra.mxu0 0.0
    %562 = vmatprep.subr.mxu0 0.0
    %563 = vmatpush1.msra.mxu0 0.0
    %564 = vmatprep.subr.mxu0 0.0
    %565 = vmatpush1.msra.mxu0 0.0
    %566 = vmatprep.subr.mxu0 0.0
    %567 = vmatpush1.msra.mxu0 0.0
    %568 = vmatprep.subr.mxu0 0.0
    %569 = vmatpush1.msra.mxu0 0.0
    %570 = vmatprep.subr.mxu0 0.0
    %571 = vmatpush1.msra.mxu0 0.0
    %572 = vmatprep.subr.mxu0 0.0
    %573 = vmatpush1.msra.mxu0 0.0
    %574 = vmatprep.subr.mxu0 0.0
    %575 = vmatpush1.msra.mxu0 0.0
    %576 = vmatprep.subr.mxu0 0.0
    %577 = vmatpush1.msra.mxu0 0.0
    %578 = vmatprep.subr.mxu0 0.0
    %579 = vmatpush1.msra.mxu0 0.0
    %580 = vmatprep.subr.mxu0 0.0
    %581 = vmatpush1.msra.mxu0 0.0
    %582 = vmatprep.subr.mxu0 0.0
    %583 = vmatpush1.msra.mxu0 0.0
    %584 = vmatprep.subr.mxu0 0.0
    %585 = vmatpush1.msra.mxu0 0.0
    %586 = vmatprep.subr.mxu0 0.0
    %587 = vmatpush1.msra.mxu0 0.0
    %588 = vmatprep.subr.mxu0 0.0
    %589 = vmatpush1.msra.mxu0 0.0
    %590 = vmatprep.subr.mxu0 0.0
    %591 = vmatpush1.msra.mxu0 0.0
    %592 = vmatprep.subr.mxu0 0.0
    %593 = vmatpush1.msra.mxu0 0.0
    %594 = vmatprep.subr.mxu0 0.0
    %595 = vmatpush1.msra.mxu0 0.0
    %596 = vmatprep.subr.mxu0 0.0
    %597 = vmatpush1.msra.mxu0 0.0
    %598 = vmatprep.subr.mxu0 0.0
    %599 = vmatpush1.msra.mxu0 0.0
    %600 = vmatprep.subr.mxu0 0.0
    %601 = vmatpush1.msra.mxu0 0.0
    %602 = vmatprep.subr.mxu0 0.0
    %603 = vmatpush1.msra.mxu0 0.0
    %604 = vmatprep.subr.mxu0 0.0
    %605 = vmatpush1.msra.mxu0 0.0
    %606 = vmatprep.subr.mxu0 0.0
    %607 = vmatpush1.msra.mxu0 0.0
    %608 = vmatprep.subr.mxu0 0.0
    %609 = vmatpush1.msra.mxu0 0.0
    %610 = vmatprep.subr.mxu0 0.0
    %611 = vmatpush1.msra.mxu0 0.0
    %612 = vmatprep.mubr.f32.mxu0 0.0
    %613 = vmatmul.mubr.f32.gmra.mrb[0].mxu0 %v546
    %v614 = vpop.f32.mrb[0].mxu0
    %v615 = vadd.f32 %v497, %v614
    %v616 = vpop.f32.mrb[0].mxu0
    %617 = vdwg.mxu0
    %v618 = vld [vmem:[%s7] sm:$0x1]
    %v619 = vld [vmem:[%s8] sm:$0x1]
    %v620 = vsel %vm268, %v615, 0.0
    %621 = vadd.xlane.f32.xlu0 %v620
    %v622 = vpop.xlane.xlu0 %621
    %v623 = vmul.f32 %v615, %v615
    %v624 = vsel %vm268, %v623, 0.0
    %625 = vadd.xlane.f32.xlu0 %v624
    %v626 = vpop.xlane.xlu0 %625
    %v627 = vmul.f32 %v622, 0.03125
    %v628 = vmul.f32 %v626, 0.03125
    %v629 = vmul.f32 %v627, %v627
    %v630 = vsub.f32 %v628, %v629
    %v631 = vsub.f32 %v615, %v627
    %v632 = vadd.f32 %v630, 1e-05
    %v633 = vrsqrt.pop %v632
    %v634 = vmul.f32 %v631, %v633
    %v636 = vlaneseq
    %v637 = vshrl.u32 %v636, 7
    %v638 = vsub.s32 0, %v637
    %v639 = vrot.slane %v618, %v638
    %v641 = vmul.f32 %v634, %v639
    %v643 = vlaneseq
    %v644 = vshrl.u32 %v643, 7
    %v645 = vsub.s32 0, %v644
    %v646 = vrot.slane %v619, %v645
    %v648 = vadd.f32 %v641, %v646
    %v649 = vxor.u32 %v648, 2147483648
    %v650 = vmul.f32 %v649, 1.442695
    %v651 = vpow.pop %v650
    %v652 = vadd.f32 %v651, 1.0
    %v653 = vrcp.pop %v652
    %v654 = vmul.f32 1.0, %v653
    %v655 = vmul.f32 %v648, %v654
    %v656 = vld [vmem:[%s9] sm:$0xff]
    %v657 = vld [vmem:[%s9 + $0x8] sm:$0xff]
    %v658 = vld [vmem:[%s9 + $0x10] sm:$0xff]
    %v659 = vld [vmem:[%s9 + $0x18] sm:$0xff]
    %v661 = vsel %vm268, %v655, 0
    %663 = vmatprep.subr.mxu0 0.0
    %664 = vmatpush1.msra.mxu0 %v656
    %665 = vmatprep.subr.mxu0 0.0
    %666 = vmatpush1.msra.mxu0 %v657
    %667 = vmatprep.subr.mxu0 0.0
    %668 = vmatpush1.msra.mxu0 %v658
    %669 = vmatprep.subr.mxu0 0.0
    %670 = vmatpush1.msra.mxu0 %v659
    %671 = vmatprep.subr.mxu0 0.0
    %672 = vmatpush1.msra.mxu0 0.0
    %673 = vmatprep.subr.mxu0 0.0
    %674 = vmatpush1.msra.mxu0 0.0
    %675 = vmatprep.subr.mxu0 0.0
    %676 = vmatpush1.msra.mxu0 0.0
    %677 = vmatprep.subr.mxu0 0.0
    %678 = vmatpush1.msra.mxu0 0.0
    %679 = vmatprep.subr.mxu0 0.0
    %680 = vmatpush1.msra.mxu0 0.0
    %681 = vmatprep.subr.mxu0 0.0
    %682 = vmatpush1.msra.mxu0 0.0
    %683 = vmatprep.subr.mxu0 0.0
    %684 = vmatpush1.msra.mxu0 0.0
    %685 = vmatprep.subr.mxu0 0.0
    %686 = vmatpush1.msra.mxu0 0.0
    %687 = vmatprep.subr.mxu0 0.0
    %688 = vmatpush1.msra.mxu0 0.0
    %689 = vmatprep.subr.mxu0 0.0
    %690 = vmatpush1.msra.mxu0 0.0
    %691 = vmatprep.subr.mxu0 0.0
    %692 = vmatpush1.msra.mxu0 0.0
    %693 = vmatprep.subr.mxu0 0.0
    %694 = vmatpush1.msra.mxu0 0.0
    %695 = vmatprep.subr.mxu0 0.0
    %696 = vmatpush1.msra.mxu0 0.0
    %697 = vmatprep.subr.mxu0 0.0
    %698 = vmatpush1.msra.mxu0 0.0
    %699 = vmatprep.subr.mxu0 0.0
    %700 = vmatpush1.msra.mxu0 0.0
    %701 = vmatprep.subr.mxu0 0.0
    %702 = vmatpush1.msra.mxu0 0.0
    %703 = vmatprep.subr.mxu0 0.0
    %704 = vmatpush1.msra.mxu0 0.0
    %705 = vmatprep.subr.mxu0 0.0
    %706 = vmatpush1.msra.mxu0 0.0
    %707 = vmatprep.subr.mxu0 0.0
    %708 = vmatpush1.msra.mxu0 0.0
    %709 = vmatprep.subr.mxu0 0.0
    %710 = vmatpush1.msra.mxu0 0.0
    %711 = vmatprep.subr.mxu0 0.0
    %712 = vmatpush1.msra.mxu0 0.0
    %713 = vmatprep.subr.mxu0 0.0
    %714 = vmatpush1.msra.mxu0 0.0
    %715 = vmatprep.subr.mxu0 0.0
    %716 = vmatpush1.msra.mxu0 0.0
    %717 = vmatprep.subr.mxu0 0.0
    %718 = vmatpush1.msra.mxu0 0.0
    %719 = vmatprep.subr.mxu0 0.0
    %720 = vmatpush1.msra.mxu0 0.0
    %721 = vmatprep.subr.mxu0 0.0
    %722 = vmatpush1.msra.mxu0 0.0
    %723 = vmatprep.subr.mxu0 0.0
    %724 = vmatpush1.msra.mxu0 0.0
    %725 = vmatprep.subr.mxu0 0.0
    %726 = vmatpush1.msra.mxu0 0.0
    %727 = vmatprep.mubr.f32.mxu0 0.0
    %728 = vmatmul.mubr.f32.gmra.mrb[0].mxu0 %v661
    %v729 = vpop.f32.mrb[0].mxu0
    %v730 = vadd.f32 0.0, %v729
    %v731 = vpop.f32.mrb[0].mxu0
    %732 = vdwg.mxu0
    %733 = vst [vmem:[#allocation7] sm:$0xff] %v730
    // Predicated region
    $region50: #{tpu_custom_call.1} parent=1 // pred_check
      _
    $region51: #{tpu_custom_call.1} parent=1 // pred_check_branch
      %735 = sbr.rel (0) target = $region53
    $region52: #{tpu_custom_call.1} parent=1 // pred_region
      %s737 = ssub.s32 128, 128
      %738 = vsyncadd [#allocation4], %s737
      %s740 = sshll.u32 [#allocation7], 4
      %s741 = int_to_ptr.vmem [resolvable:$true] %s740
      %743 = dma.vmem_to_hbm [thread:$0]  %s741, 128, %s10, [#allocation4]
    $region53: #{tpu_custom_call.1} parent=1 // pred_fallthru
      _
    // Predicated region
    $region54: #{tpu_custom_call.1} parent=1 // pred_check
      _
    $region55: #{tpu_custom_call.1} parent=1 // pred_check_branch
      %745 = sbr.rel (0) target = $region57
    $region56: #{tpu_custom_call.1} parent=1 // pred_region
      %746 = dma.done [#allocation4], 128
    $region57: #{tpu_custom_call.1} parent=1 // pred_fallthru
      _
    %747 = vsyncpa [#allocation3], 1
    %748 = vsyncpa [#allocation6], 1
    %749 = vsyncpa [#allocation4], 1

</llo_original>
